<compile_context>
chip_gen: v7x
topology: tpu7x:2x2x1
jax: 0.10.0
libtpu: 0.0.40
codegen_flags: <defaults>
</compile_context>

<pallas_src>
import functools

import jax
import jax.numpy as jnp
from jax import lax
from jax.experimental import pallas as pl
from jax.experimental.pallas import tpu as pltpu


def _pick_tm(M, K):
    """Largest lane tile (multiple of 128) with >=2 grid steps when possible
    (v7x has 2 TensorCores) and a modest double-buffered VMEM footprint."""
    tm = 1024
    while tm > 128 and M < 2 * tm:
        tm //= 2
    while tm > 128 and 2 * K * tm * 2 > 16 * 1024 * 1024:  # bf16 patches, 2 buffers
        tm //= 2
    return tm


def _srl(v, n):
    """Logical right shift (shape/dtype-safe for both Mosaic and interpret)."""
    return lax.shift_right_logical(v, jnp.full(v.shape, n, v.dtype))


def _conv_bn_act_kernel(w_ref, p_ref, b_ref, *rest, relu, dropout_p, seed,
                        cout, tm, add_residual):
    """One lane tile of: conv matmul + BN bias [+ReLU] [+dropout] [+residual+ReLU].

    w_ref: (Cout, K) bf16 (BN scale pre-folded), p_ref: (K, TM) bf16,
    b_ref: (Cout, 1) f32, optional idn_ref: (Cout, TM) f32, out: (Cout, TM).
    """
    if add_residual:
        idn_ref, out_ref = rest
    else:
        (out_ref,) = rest

    # conv (im2col matmul) on the MXU, f32 accumulate. Lane dim = output pixels.
    y = jnp.dot(w_ref[...], p_ref[...], preferred_element_type=jnp.float32)
    y = y + b_ref[...]                      # folded BN bias (lane broadcast)
    if relu:
        y = jnp.maximum(y, 0.0)
    if dropout_p > 0.0:
        # F.dropout(p) training-mode: zero w.p. p, scale kept values by 1/(1-p).
        # Counter-based hash of the global element index -> mask is independent
        # of the tiling; keep-test stays in integer space (no int->float mul).
        c_idx = lax.broadcasted_iota(jnp.int32, y.shape, 0)
        m_idx = lax.broadcasted_iota(jnp.int32, y.shape, 1) + pl.program_id(0) * tm
        h = m_idx * cout + c_idx + seed
        h = h * (-1640531527)               # 0x9E3779B9 (wraps mod 2^32)
        h = h ^ _srl(h, 16)
        h = h * (-2048144789)               # 0x85EBCA6B
        h = h ^ _srl(h, 13)
        h = h * (-1028477387)               # 0xC2B2AE35
        h = h ^ _srl(h, 16)
        threshold = int(dropout_p * (1 << 23))
        keep = (h & 0x7FFFFF) >= threshold
        y = jnp.where(keep, y * (1.0 / (1.0 - dropout_p)), 0.0)
    if add_residual:
        y = jnp.maximum(y + idn_ref[...].astype(jnp.float32), 0.0)
    out_ref[...] = y.astype(out_ref.dtype)


def _im2col_cnhw(x, ks, stride, pad):
    """x: (C, N, H, W) -> transposed patches (K = ks*ks*C, M = N*Hout*Wout)."""
    C, N, H, W = x.shape
    xp = jnp.pad(x, ((0, 0), (0, 0), (pad, pad), (pad, pad)))
    Hout = (H + 2 * pad - ks) // stride + 1
    Wout = (W + 2 * pad - ks) // stride + 1
    rows = []
    for kh in range(ks):
        for kw in range(ks):
            sl = lax.slice(
                xp, (0, 0, kh, kw),
                (C, N, kh + stride * (Hout - 1) + 1, kw + stride * (Wout - 1) + 1),
                (1, 1, stride, stride))                   # (C, N, Hout, Wout)
            rows.append(sl.reshape(C, N * Hout * Wout))
    return jnp.concatenate(rows, axis=0), (N, Hout, Wout)


def conv_block(x_cnhw, params, *, stride=1, relu=False, dropout_p=0.0,
               training=True, seed=0, identity_flat=None,
               out_dtype=jnp.float32, eps=1e-5):
    """ConvBlock forward (3x3 conv pad=1 + BatchNorm2d [+ReLU]) in CNHW layout.

    If `identity_flat` (Cout, M) is given, the kernel also fuses
    `relu(out + identity)` (the ResBlock tail)."""
    # TODO(synk): im2col is still materialized wrapper-side (9x activation bytes,
    # though in bf16); a true in-kernel halo-DMA im2col needs Element/manual-DMA
    # BlockSpecs that are not portable to the interpret fallback.
    w, b, gamma, beta, rmean, rvar = params
    Cout = w.shape[0]

    # bf16 MXU operands; im2col is done on the bf16 copy so the 9x intermediate
    # is half-width too.
    patches_t, (N, Hout, Wout) = _im2col_cnhw(
        x_cnhw.astype(jnp.bfloat16), 3, stride, 1)
    K, M = patches_t.shape

    # Fold BatchNorm (inference running stats) into the conv weights / bias.
    scale = gamma / jnp.sqrt(rvar + eps)                         # (Cout,)
    w2d = jnp.transpose(w, (0, 2, 3, 1)).reshape(Cout, K)        # tap-major, C-minor
    w_scaled = (w2d * scale[:, None]).astype(jnp.bfloat16)       # (Cout, K)
    bias = ((b - rmean) * scale + beta).reshape(Cout, 1).astype(jnp.float32)

    TM = _pick_tm(M, K)
    Mp = ((M + TM - 1) // TM) * TM
    patches_t = jnp.pad(patches_t, ((0, 0), (0, Mp - M)))

    add_residual = identity_flat is not None
    inputs = [w_scaled, patches_t, bias]
    in_specs = [
        pl.BlockSpec((Cout, K), lambda i: (0, 0)),
        pl.BlockSpec((K, TM), lambda i: (0, i)),
        pl.BlockSpec((Cout, 1), lambda i: (0, 0)),
    ]
    if add_residual:
        idn = jnp.pad(identity_flat.astype(jnp.float32), ((0, 0), (0, Mp - M)))
        inputs.append(idn)
        in_specs.append(pl.BlockSpec((Cout, TM), lambda i: (0, i)))

    drop_p = float(dropout_p) if training else 0.0
    kernel = functools.partial(
        _conv_bn_act_kernel, relu=relu, dropout_p=drop_p,
        seed=int(seed) & 0x7FFFFFFF, cout=Cout, tm=TM, add_residual=add_residual)

    # Explicit VMEM budget: streamed tiles double-buffered + resident weights.
    tile_bytes = (2 * K * TM * 2 + 2 * Cout * TM * 4
                  + (2 * Cout * TM * 4 if add_residual else 0)
                  + Cout * K * 2 + Cout * 4)
    vmem_limit = int(min(max(4 * tile_bytes, 8 * 1024 * 1024), 32 * 1024 * 1024))

    out = pl.pallas_call(
        kernel,
        out_shape=jax.ShapeDtypeStruct((Cout, Mp), out_dtype),
        grid_spec=pltpu.PrefetchScalarGridSpec(
            num_scalar_prefetch=0,
            grid=(Mp // TM,),
            in_specs=in_specs,
            out_specs=pl.BlockSpec((Cout, TM), lambda i: (0, i)),
        ),
        compiler_params=pltpu.CompilerParams(
            dimension_semantics=("parallel",),
            vmem_limit_bytes=vmem_limit),
    )(*inputs)

    return out[:, :M].reshape(Cout, N, Hout, Wout)


def init_conv_block(key, in_c, out_c):
    """Deterministic synthetic parameters matching nn.Conv2d(3x3) + BatchNorm2d."""
    k1, k2, k3, k4 = jax.random.split(key, 4)
    w = jax.random.normal(k1, (out_c, in_c, 3, 3), jnp.float32) * 0.1
    b = jax.random.normal(k2, (out_c,), jnp.float32) * 0.1
    gamma = 1.0 + 0.1 * jax.random.normal(k3, (out_c,), jnp.float32)
    beta = 0.1 * jax.random.normal(k4, (out_c,), jnp.float32)
    rmean = jnp.zeros((out_c,), jnp.float32)
    rvar = jnp.ones((out_c,), jnp.float32)
    return (w, b, gamma, beta, rmean, rvar)


def resblock_forward(x_nchw, params, *, stride=1, seed=0, training=True):
    # TODO(synk): BatchNorm uses inference-mode running statistics (fresh-init
    # mean=0, var=1); training-mode per-batch statistics are not reduced
    # in-kernel. Dropout matches F.dropout(p=0.1) in distribution (hash-based
    # mask), not torch's exact RNG stream.
    x = jnp.transpose(x_nchw, (1, 0, 2, 3))          # NCHW -> CNHW (pixels -> lanes)
    h1 = conv_block(x, params["conv1"], stride=stride, relu=True,
                    dropout_p=0.1, training=training, seed=seed,
                    out_dtype=jnp.bfloat16)          # bf16 inter-kernel activation
    if stride > 1:
        ident = conv_block(x, params["downsample"], stride=stride)
    else:
        ident = x
    ident_flat = ident.reshape(ident.shape[0], -1).astype(jnp.float32)
    out = conv_block(h1, params["conv2"], stride=1, relu=False,
                     identity_flat=ident_flat)       # fused + identity -> ReLU
    return jnp.transpose(out, (1, 0, 2, 3))          # CNHW -> NCHW


# ---------------- pure-JAX reference (eval mode, for a sanity check) ----------
def _ref_conv_block(x, p, stride, relu_flag, eps=1e-5):
    w, b, gamma, beta, rmean, rvar = p
    y = lax.conv_general_dilated(x, w, (stride, stride), ((1, 1), (1, 1)),
                                 dimension_numbers=("NCHW", "OIHW", "NCHW"))
    y = y + b[None, :, None, None]
    y = ((y - rmean[None, :, None, None])
         * (gamma / jnp.sqrt(rvar + eps))[None, :, None, None]
         + beta[None, :, None, None])
    return jnp.maximum(y, 0.0) if relu_flag else y


def _ref_resblock(x, params, stride):
    h = _ref_conv_block(x, params["conv1"], stride, True)
    h = _ref_conv_block(h, params["conv2"], 1, False)
    ident = (_ref_conv_block(x, params["downsample"], stride, False)
             if stride > 1 else x)
    return jnp.maximum(h + ident, 0.0)


if __name__ == "__main__":
    key = jax.random.PRNGKey(0)
    kx, k1, k2, k3 = jax.random.split(key, 4)

    x = jax.random.normal(kx, (2, 4, 16, 16), jnp.float32)

    # ResBlock(in_c=4, out_c=4, stride=1): identity skip connection.
    params_s1 = {"conv1": init_conv_block(k1, 4, 4),
                 "conv2": init_conv_block(k2, 4, 4)}
    y1 = resblock_forward(x, params_s1, stride=1, seed=1234)
    jax.block_until_ready(y1)
    assert y1.shape == (2, 4, 16, 16)
    assert bool(jnp.all(y1 >= 0.0))          # final ReLU

    # eval-mode (dropout off) numerical check against a pure-JAX reference.
    y1_eval = resblock_forward(x, params_s1, stride=1, seed=1234, training=False)
    y1_ref = _ref_resblock(x, params_s1, 1)
    assert bool(jnp.allclose(y1_eval, y1_ref, atol=1e-1, rtol=1e-1)), \
        float(jnp.max(jnp.abs(y1_eval - y1_ref)))

    # ResBlock(in_c=4, out_c=8, stride=2): 3x3 downsample conv on the skip path
    # (matches the reference ConvBlock(in_c, out_c, stride=stride) spec).
    params_s2 = {"conv1": init_conv_block(k1, 4, 8),
                 "conv2": init_conv_block(k2, 8, 8),
                 "downsample": init_conv_block(k3, 4, 8)}
    y2 = resblock_forward(x, params_s2, stride=2, seed=5678)
    jax.block_until_ready(y2)
    assert y2.shape == (2, 8, 8, 8)
    assert bool(jnp.all(y2 >= 0.0))

    y2_eval = resblock_forward(x, params_s2, stride=2, seed=5678, training=False)
    y2_ref = _ref_resblock(x, params_s2, 2)
    assert bool(jnp.allclose(y2_eval, y2_ref, atol=1e-1, rtol=1e-1)), \
        float(jnp.max(jnp.abs(y2_eval - y2_ref)))

    print("KERNEL_OK")
</pallas_src>

<mosaic_0001>
module attributes {stable_mosaic.version = 11 : i64} {
  func.func @_conv_bn_act_kernel(%arg0: i32, %arg1: memref<4x36xbf16, #tpu.memory_space<vmem>>, %arg2: memref<36x256xbf16, #tpu.memory_space<vmem>>, %arg3: memref<4x1xf32, #tpu.memory_space<vmem>>, %arg4: memref<4x256xbf16, #tpu.memory_space<vmem>>) attributes {dimension_semantics = [#tpu.dimension_semantics<parallel>], iteration_bounds = array<i64: 2>, scalar_prefetch = 0 : i64, scratch_operands = 0 : i64, tpu.core_type = #tpu.core_type<tc>, window_params = [{pipeline_mode = #tpu.pipeline_mode<synchronous>, transform_indices = @transform_0, window_bounds = array<i64: 4, 36>}, {transform_indices = @transform_1, window_bounds = array<i64: 36, 256>}, {pipeline_mode = #tpu.pipeline_mode<synchronous>, transform_indices = @transform_2, window_bounds = array<i64: 4, 1>}, {transform_indices = @transform_3, window_bounds = array<i64: 4, 256>}]} {
    %c0 = arith.constant 0 : index
    %c0_0 = arith.constant 0 : index
    %0 = vector.load %arg1[%c0, %c0_0] : memref<4x36xbf16, #tpu.memory_space<vmem>>, vector<4x36xbf16>
    %c0_1 = arith.constant 0 : index
    %c0_2 = arith.constant 0 : index
    %1 = vector.load %arg2[%c0_1, %c0_2] : memref<36x256xbf16, #tpu.memory_space<vmem>>, vector<36x256xbf16>
    %cst = arith.constant dense<0.000000e+00> : vector<4x256xf32>
    %2 = tpu.matmul %0, %1, %cst {dimension_numbers = #tpu.dot_dimension_numbers<[1], [0], [0], [1], [0, 0, 1, 1], [], []>} : vector<4x36xbf16>, vector<36x256xbf16>, vector<4x256xf32> -> vector<4x256xf32>
    %c0_3 = arith.constant 0 : index
    %c0_4 = arith.constant 0 : index
    %3 = vector.load %arg3[%c0_3, %c0_4] : memref<4x1xf32, #tpu.memory_space<vmem>>, vector<4x1xf32>
    %4 = vector.broadcast %3 : vector<4x1xf32> to vector<4x256xf32>
    %5 = arith.addf %2, %4 : vector<4x256xf32>
    %cst_5 = arith.constant 0.000000e+00 : f32
    %6 = vector.broadcast %cst_5 : f32 to vector<4x256xf32>
    %7 = arith.maximumf %5, %6 : vector<4x256xf32>
    %8 = tpu.iota {dimensions = array<i32: 0>} : vector<4x256xi32>
    %9 = tpu.iota {dimensions = array<i32: 1>} : vector<4x256xi32>
    %c256_i32 = arith.constant 256 : i32
    %10 = arith.muli %arg0, %c256_i32 : i32
    %11 = vector.broadcast %10 : i32 to vector<4x256xi32>
    %12 = arith.addi %9, %11 : vector<4x256xi32>
    %c4_i32 = arith.constant 4 : i32
    %13 = vector.broadcast %c4_i32 : i32 to vector<4x256xi32>
    %14 = arith.muli %12, %13 : vector<4x256xi32>
    %15 = arith.addi %14, %8 : vector<4x256xi32>
    %c1234_i32 = arith.constant 1234 : i32
    %16 = vector.broadcast %c1234_i32 : i32 to vector<4x256xi32>
    %17 = arith.addi %15, %16 : vector<4x256xi32>
    %c-1640531527_i32 = arith.constant -1640531527 : i32
    %18 = vector.broadcast %c-1640531527_i32 : i32 to vector<4x256xi32>
    %19 = arith.muli %17, %18 : vector<4x256xi32>
    %c16_i32 = arith.constant 16 : i32
    %20 = vector.broadcast %c16_i32 : i32 to vector<4x256xi32>
    %21 = arith.shrui %19, %20 : vector<4x256xi32>
    %22 = arith.xori %19, %21 : vector<4x256xi32>
    %c-2048144789_i32 = arith.constant -2048144789 : i32
    %23 = vector.broadcast %c-2048144789_i32 : i32 to vector<4x256xi32>
    %24 = arith.muli %22, %23 : vector<4x256xi32>
    %c13_i32 = arith.constant 13 : i32
    %25 = vector.broadcast %c13_i32 : i32 to vector<4x256xi32>
    %26 = arith.shrui %24, %25 : vector<4x256xi32>
    %27 = arith.xori %24, %26 : vector<4x256xi32>
    %c-1028477387_i32 = arith.constant -1028477387 : i32
    %28 = vector.broadcast %c-1028477387_i32 : i32 to vector<4x256xi32>
    %29 = arith.muli %27, %28 : vector<4x256xi32>
    %c16_i32_6 = arith.constant 16 : i32
    %30 = vector.broadcast %c16_i32_6 : i32 to vector<4x256xi32>
    %31 = arith.shrui %29, %30 : vector<4x256xi32>
    %32 = arith.xori %29, %31 : vector<4x256xi32>
    %c8388607_i32 = arith.constant 8388607 : i32
    %33 = vector.broadcast %c8388607_i32 : i32 to vector<4x256xi32>
    %34 = arith.andi %32, %33 : vector<4x256xi32>
    %c838860_i32 = arith.constant 838860 : i32
    %35 = vector.broadcast %c838860_i32 : i32 to vector<4x256xi32>
    %36 = arith.cmpi sge, %34, %35 : vector<4x256xi32>
    %cst_7 = arith.constant 1.11111116 : f32
    %37 = vector.broadcast %cst_7 : f32 to vector<4x256xf32>
    %38 = arith.mulf %7, %37 : vector<4x256xf32>
    %cst_8 = arith.constant 0.000000e+00 : f32
    %39 = vector.broadcast %cst_8 : f32 to vector<4x256xf32>
    %40 = arith.select %36, %38, %39 : vector<4x256xi1>, vector<4x256xf32>
    %41 = arith.truncf %40 : vector<4x256xf32> to vector<4x256xbf16>
    %c0_9 = arith.constant 0 : index
    %c0_10 = arith.constant 0 : index
    %42 = vector.load %arg4[%c0_9, %c0_10] : memref<4x256xbf16, #tpu.memory_space<vmem>>, vector<4x256xbf16>
    tpu.vector_store %arg4[%c0_9, %c0_10], %41 {strides = array<i32>} : memref<4x256xbf16, #tpu.memory_space<vmem>>, vector<4x256xbf16>,
    return
  }
  func.func @transform_0(%arg0: i32) -> (i32, i32) {
    %c0_i32 = arith.constant 0 : i32
    %c0_i32_0 = arith.constant 0 : i32
    %c0_i32_1 = arith.constant 0 : i32
    return %c0_i32, %c0_i32_0 : i32, i32
  }
  func.func @transform_1(%arg0: i32) -> (i32, i32) {
    %c0_i32 = arith.constant 0 : i32
    %c0_i32_0 = arith.constant 0 : i32
    return %c0_i32, %arg0 : i32, i32
  }
  func.func @transform_2(%arg0: i32) -> (i32, i32) {
    %c0_i32 = arith.constant 0 : i32
    %c0_i32_0 = arith.constant 0 : i32
    %c0_i32_1 = arith.constant 0 : i32
    return %c0_i32, %c0_i32_0 : i32, i32
  }
  func.func @transform_3(%arg0: i32) -> (i32, i32) {
    %c0_i32 = arith.constant 0 : i32
    %c0_i32_0 = arith.constant 0 : i32
    return %c0_i32, %arg0 : i32, i32
  }
}

</mosaic_0001>

<llo_original>
// kernel: tpu_custom_call.1
$region0: #{tpu_custom_call.1}
  #allocation0 [shape = 'u32[]', space=smem, size = 0x4, offset = 0x4, fixed_abs, tag = 'smem constant byte address 0x4 - core index']
  #allocation1 [shape = 'u32[144,128]{1,0:T(1,128)}', space=vmem, size = 0x12000, scoped, tag = 'internal scratch']
  %s0 = inlined_call_operand.vmem [shape: bf16[4,36], index: 0, kind: input, shape index: {}]
  %s1 = inlined_call_operand.hbm [shape: bf16[36,512], index: 1, kind: input, shape index: {}]
  %s2 = inlined_call_operand.vmem [shape: f32[4,1], index: 2, kind: input, shape index: {}]
  %s3 = inlined_call_operand.hbm [shape: bf16[4,512], index: 3, kind: output, shape index: {}]
  %s4 = sld [smem:[#allocation0]]
  $region49: #{tpu_custom_call.1} parent=0
    _
  %s6 = ssub.s32 1, %s4
  %s7 = scalar_select 0, %s6, %s4
  $region1: #{tpu_custom_call.1} parent=0
    #allocation2 [shape = 'u8[40960]{0}', space=vmem, size = 0xa000, scoped, tag = 'input window, operand 1']
    #allocation3 [shape = 's32[2]{0}', space=sflag, size = 0x8, scoped, tag = 'scoped memory for tpu_custom_call.1']
    #allocation4 [shape = 's32[2]{0}', space=sflag, size = 0x8, scoped, tag = 'scoped memory for tpu_custom_call.1']
    #allocation5 [shape = 'u8[4096]{0}', space=vmem, size = 0x1000, scoped, tag = 'output window, operand 0']
    %8 = vsyncpa [#allocation3], 0
    %s9 = scalar_lea.sflag [#allocation3], 1
    %10 = vsyncpa %s9, 0
    %11 = vsyncpa [#allocation4], 0
    %s12 = scalar_lea.sflag [#allocation4], 1
    %13 = vsyncpa %s12, 0
    loop: start=0, step=1, limit=4
    $region2: #{tpu_custom_call.1} parent=1 // loop_pre_header
      _
    $region3: #{tpu_custom_call.1} parent=1 // loop_header
      %s15 = sphi 0, %s19
      %p16 = scmp.ge.s32.totalorder %s15, 4
      %s23 = sphi 0, %s23
      %s25 = sphi 0, %s23
      %s26 = sphi 0, %s25
      %s40 = sphi 0, %s26
      %s46 = sphi 0, %s48
      %s49 = sphi 0, %s46
      %s50 = sphi 0, %s49
      %s66 = sphi 0, %s50
      %s70 = sphi 0, %s70
      %s72 = sphi 0, %s70
      %s73 = sphi 0, %s72
      %s87 = sphi 0, %s73
      %s93 = sphi 0, %s95
      %s96 = sphi 0, %s93
      %s97 = sphi 0, %s96
      %s113 = sphi 0, %s97
    $region4: #{tpu_custom_call.1} parent=1 // loop_header_branch
      %18 = sbr.rel (%p16) target = $region8
    $region5: #{tpu_custom_call.1} parent=1 // loop_body
      %s20 = ssub.s32 %s15, 1
      %s21 = ssub.s32 %s15, 2
      %s22 = sadd.s32 %s15, 1
      %s24 = sadd.s32 %s23, 1
      %p27 = scmp.eq.s32.totalorder %s15, 1
      %p28 = scmp.ne.s32.totalorder %s23, %s25
      %p29 = scmp.eq.s32.totalorder %s15, 0
      %p30 = por %p28, %p29
      %p31 = scmp.ne.s32.totalorder %s23, %s25
      %p32 = scmp.eq.s32.totalorder %s20, 1
      %p33 = por %p31, %p32
      %p34 = scmp.ne.s32.totalorder %s25, %s26
      %p35 = scmp.eq.s32.totalorder %s20, 0
      %p36 = por %p34, %p35
      %p37 = scmp.ne.s32.totalorder %s25, %s26
      %p38 = scmp.eq.s32.totalorder %s21, 1
      %p39 = por %p37, %p38
      %p41 = scmp.ne.s32.totalorder %s26, %s40
      %p42 = scmp.eq.s32.totalorder %s21, 0
      %p43 = por %p41, %p42
      %s44 = ssub.s32 %s15, %s22
      %p45 = scmp.eq.s32.totalorder %s44, 0
      %s47 = sadd.s32 %s46, 1
      %s48 = scalar_select %p45, %s46, %s47
      %p51 = pneg %p45
      %p52 = scmp.eq.s32.totalorder %s15, 1
      %p53 = por %p51, %p52
      %p54 = scmp.ne.s32.totalorder %s46, %s49
      %p55 = scmp.eq.s32.totalorder %s15, 0
      %p56 = por %p54, %p55
      %p57 = scmp.ne.s32.totalorder %s46, %s49
      %p58 = scmp.eq.s32.totalorder %s20, 1
      %p59 = por %p57, %p58
      %p60 = scmp.ne.s32.totalorder %s49, %s50
      %p61 = scmp.eq.s32.totalorder %s20, 0
      %p62 = por %p60, %p61
      %p63 = scmp.ne.s32.totalorder %s49, %s50
      %p64 = scmp.eq.s32.totalorder %s21, 1
      %p65 = por %p63, %p64
      %p67 = scmp.ne.s32.totalorder %s50, %s66
      %p68 = scmp.eq.s32.totalorder %s21, 0
      %p69 = por %p67, %p68
      %s71 = sadd.s32 %s70, 1
      %p74 = scmp.eq.s32.totalorder %s15, 1
      %p75 = scmp.ne.s32.totalorder %s70, %s72
      %p76 = scmp.eq.s32.totalorder %s15, 0
      %p77 = por %p75, %p76
      %p78 = scmp.ne.s32.totalorder %s70, %s72
      %p79 = scmp.eq.s32.totalorder %s20, 1
      %p80 = por %p78, %p79
      %p81 = scmp.ne.s32.totalorder %s72, %s73
      %p82 = scmp.eq.s32.totalorder %s20, 0
      %p83 = por %p81, %p82
      %p84 = scmp.ne.s32.totalorder %s72, %s73
      %p85 = scmp.eq.s32.totalorder %s21, 1
      %p86 = por %p84, %p85
      %p88 = scmp.ne.s32.totalorder %s73, %s87
      %p89 = scmp.eq.s32.totalorder %s21, 0
      %p90 = por %p88, %p89
      %s91 = ssub.s32 %s15, %s22
      %p92 = scmp.eq.s32.totalorder %s91, 0
      %s94 = sadd.s32 %s93, 1
      %s95 = scalar_select %p92, %s93, %s94
      %p98 = pneg %p92
      %p99 = scmp.eq.s32.totalorder %s15, 1
      %p100 = por %p98, %p99
      %p101 = scmp.ne.s32.totalorder %s93, %s96
      %p102 = scmp.eq.s32.totalorder %s15, 0
      %p103 = por %p101, %p102
      %p104 = scmp.ne.s32.totalorder %s93, %s96
      %p105 = scmp.eq.s32.totalorder %s20, 1
      %p106 = por %p104, %p105
      %p107 = scmp.ne.s32.totalorder %s96, %s97
      %p108 = scmp.eq.s32.totalorder %s20, 0
      %p109 = por %p107, %p108
      %p110 = scmp.ne.s32.totalorder %s96, %s97
      %p111 = scmp.eq.s32.totalorder %s21, 1
      %p112 = por %p110, %p111
      %p114 = scmp.ne.s32.totalorder %s97, %s113
      %p115 = scmp.eq.s32.totalorder %s21, 0
      %p116 = por %p114, %p115
      %p117 = scmp.le.s32.totalorder 1, %s15
      %p118 = scmp.lt.s32.totalorder %s15, 3
      %p119 = pnand %p117, %p118
      %p120 = pneg %p119
      // Predicated region
      $region9: #{tpu_custom_call.1} parent=5 // pred_check
        _
      $region10: #{tpu_custom_call.1} parent=5 // pred_check_branch
        %122 = sbr.rel (%p119) target = $region12
      $region11: #{tpu_custom_call.1} parent=5 // pred_region
        %s123 = ssub.s32 %s15, 1
        // Predicated region
        $region13: #{tpu_custom_call.1} parent=11 // pred_check
          %p124 = pneg %p36
        $region14: #{tpu_custom_call.1} parent=11 // pred_check_branch
          %126 = sbr.rel (%p124) target = $region16
        $region15: #{tpu_custom_call.1} parent=11 // pred_region
          _
        $region16: #{tpu_custom_call.1} parent=11 // pred_fallthru
          _
        // Predicated region
        $region17: #{tpu_custom_call.1} parent=11 // pred_check
          %p127 = pneg %p83
        $region18: #{tpu_custom_call.1} parent=11 // pred_check_branch
          %129 = sbr.rel (%p127) target = $region20
        $region19: #{tpu_custom_call.1} parent=11 // pred_region
          _
        $region20: #{tpu_custom_call.1} parent=11 // pred_fallthru
          _
      $region12: #{tpu_custom_call.1} parent=5 // pred_fallthru
        _
      %p130 = scmp.lt.s32.totalorder %s15, 2
      // Predicated region
      $region21: #{tpu_custom_call.1} parent=5 // pred_check
        %p131 = pneg %p130
      $region22: #{tpu_custom_call.1} parent=5 // pred_check_branch
        %133 = sbr.rel (%p131) target = $region24
      $region23: #{tpu_custom_call.1} parent=5 // pred_region
        // Predicated region
        $region25: #{tpu_custom_call.1} parent=23 // pred_check
          %p134 = pneg %p56
        $region26: #{tpu_custom_call.1} parent=23 // pred_check_branch
          %136 = sbr.rel (%p134) target = $region28
        $region27: #{tpu_custom_call.1} parent=23 // pred_region
          %s137 = sand.u32 %s46, 1
          %s138 = scalar_lea.sflag [#allocation3], %s137
          %s139 = sand.u32 %s46, 1
          %s140 = smul.addr %s139, 40
          %s141 = scalar_lea.vmem [#allocation2], %s140
          %s142 = smul.u32 2, %s15
          %s144 = ssub.s32 640, 640
          %145 = vsyncadd %s138, %s144
          %s146 = smul.addr %s142, 64
          %s147 = scalar_lea.hbm %s1, %s146
          %s148 = sshll.u32 %s141, 4
          %s149 = int_to_ptr.vmem [resolvable:$true] %s148
          %154 = dma.hbm_to_vmem [thread:$0]  %s147, 640, %s149, %s138, 256, 128, 8
        $region28: #{tpu_custom_call.1} parent=23 // pred_fallthru
          _
      $region24: #{tpu_custom_call.1} parent=5 // pred_fallthru
        _
      %p155 = scmp.le.s32.totalorder 1, %s15
      %p156 = scmp.lt.s32.totalorder %s15, 3
      %p157 = pnand %p155, %p156
      %p158 = pneg %p157
      // Predicated region
      $region29: #{tpu_custom_call.1} parent=5 // pred_check
        _
      $region30: #{tpu_custom_call.1} parent=5 // pred_check_branch
        %160 = sbr.rel (%p157) target = $region32
      $region31: #{tpu_custom_call.1} parent=5 // pred_region
        %s161 = ssub.s32 %s15, 1
        %s162 = sand.u32 %s49, 1
        %s163 = scalar_lea.sflag [#allocation3], %s162
        %s164 = sand.u32 %s49, 1
        %s165 = smul.addr %s164, 40
        %s166 = scalar_lea.vmem [#allocation2], %s165
        // Predicated region
        $region33: #{tpu_custom_call.1} parent=31 // pred_check
          %p167 = pneg %p62
        $region34: #{tpu_custom_call.1} parent=31 // pred_check_branch
          %169 = sbr.rel (%p167) target = $region36
        $region35: #{tpu_custom_call.1} parent=31 // pred_region
          %170 = dma.done %s163, 640
        $region36: #{tpu_custom_call.1} parent=31 // pred_fallthru
          _
        %p171 = pneg %p36
        %p172 = pneg %p33
        %s173 = sand.u32 %s49, 1
        %s174 = scalar_lea.sflag [#allocation3], %s173
        %s175 = sand.u32 %s49, 1
        %s176 = smul.addr %s175, 40
        %s177 = scalar_lea.vmem [#allocation2], %s176
        %p178 = pneg %p62
        %p179 = pneg %p59
        %p180 = pneg %p83
        %p181 = pneg %p80
        %p182 = pneg %p109
        %p183 = pneg %p106
        %s184 = sand.u32 %s96, 1
        %s185 = scalar_lea.sflag [#allocation4], %s184
        %s186 = sand.u32 %s96, 1
        %s187 = smul.addr %s186, 4
        %s188 = scalar_lea.vmem [#allocation5], %s187
        %s189 = smul.u32 2, %s20
        %s190 = smul.u32 2, %s20
        %v192 = vld [vmem:[%s0] sm:$0x3]
        %v193 = vld [vmem:[%s166] sm:$0xff]
        %v194 = vld [vmem:[%s166 + $0x8] sm:$0xff]
        %v195 = vld [vmem:[%s166 + $0x10] sm:$0xff]
        %v196 = vld [vmem:[%s166 + $0x18] sm:$0xff]
        %v197 = vld [vmem:[%s166 + $0x20] sm:$0x33]
        %v198 = vld [vmem:[%s2] sm:$0xf]
        %200 = vset.pattern.permute.xlu0 0
        %201 = vperm.xlu0 %200, %v198
        %v202 = vpop.permute.xlu0 %201
        %v209 = vunpack.c.l.b16 %v193
        %v210 = vunpack.c.h.b16 %v193
        %v211 = vunpack.c.l.b16 %v194
        %v212 = vunpack.c.h.b16 %v194
        %v213 = vunpack.c.l.b16 %v195
        %v214 = vunpack.c.h.b16 %v195
        %v215 = vunpack.c.l.b16 %v196
        %v216 = vunpack.c.h.b16 %v196
        %v217 = vunpack.c.l.b16 %v197
        %v218 = vunpack.c.h.b16 %v197
        %v219 = vpack.c.b16 %v211, %v209
        %v220 = vpack.c.b16 %v212, %v210
        %v221 = vpack.c.b16 %v215, %v213
        %v222 = vpack.c.b16 %v216, %v214
        %v223 = vpack.c.b16 %v217, %v217
        %v224 = vpack.c.b16 %v218, %v218
        %vm229 = vcmask 293888
        %v231 = vsel %vm229, %v192, 0
        %vm233 = vcmask 1041408
        %v235 = vsel %vm233, %v223, 0
        %v238 = vsel %vm233, %v224, 0
        %240 = vmatprep.subr.bf16.mxu0 %v220
        %241 = vmatpush1.bf16.msra.mxu0 %v219
        %242 = vmatprep.subr.bf16.mxu0 %v222
        %243 = vmatpush1.bf16.msra.mxu0 %v221
        %244 = vmatprep.subr.bf16.mxu0 %v238
        %245 = vmatpush1.bf16.msra.mxu0 %v235
        %246 = vmatprep.subr.bf16.mxu0 0
        %247 = vmatpush1.bf16.msra.mxu0 0
        %248 = vmatprep.subr.bf16.mxu0 0
        %249 = vmatpush1.bf16.msra.mxu0 0
        %250 = vmatprep.subr.bf16.mxu0 0
        %251 = vmatpush1.bf16.msra.mxu0 0
        %252 = vmatprep.subr.bf16.mxu0 0
        %253 = vmatpush1.bf16.msra.mxu0 0
        %254 = vmatprep.subr.bf16.mxu0 0
        %255 = vmatpush1.bf16.msra.mxu0 0
        %256 = vmatprep.subr.bf16.mxu0 0
        %257 = vmatpush1.bf16.msra.mxu0 0
        %258 = vmatprep.subr.bf16.mxu0 0
        %259 = vmatpush1.bf16.msra.mxu0 0
        %260 = vmatprep.subr.bf16.mxu0 0
        %261 = vmatpush1.bf16.msra.mxu0 0
        %262 = vmatprep.subr.bf16.mxu0 0
        %263 = vmatpush1.bf16.msra.mxu0 0
        %264 = vmatprep.subr.bf16.mxu0 0
        %265 = vmatpush1.bf16.msra.mxu0 0
        %266 = vmatprep.subr.bf16.mxu0 0
        %267 = vmatpush1.bf16.msra.mxu0 0
        %268 = vmatprep.subr.bf16.mxu0 0
        %269 = vmatpush1.bf16.msra.mxu0 0
        %270 = vmatprep.subr.bf16.mxu0 0
        %271 = vmatpush1.bf16.msra.mxu0 0
        %272 = vmatprep.mubr.bf16.mxu0 0
        %273 = vmatmul.mubr.bf16.gmra.mrb[0].mxu0 %v231
        %v274 = vpop.f32.mrb[0].mxu0
        %v275 = vadd.f32 %v202, %v274
        %v276 = vpop.f32.mrb[0].mxu0
        %v277 = vadd.f32 %v202, %v276
        %v278 = vpop.f32.mrb[0].mxu0
        %v279 = vpop.f32.mrb[0].mxu0
        %280 = vdwg.mxu0
        %v281 = vmax.f32 %v275, 0.0
        %v282 = vmax.f32 %v277, 0.0
        %v283 = vlaneseq
        %v284 = vshrl.u32 %v283, 7
        %v285 = vlaneseq
        %v286 = vand.u32 %v285, 127
        %v287 = vadd.s32 %v286, 128
        %s288 = smul.u32 %s20, 256
        %v289 = vstv %s288
        %v290 = vadd.s32 %v286, %v289
        %v291 = vadd.s32 %v287, %v289
        %v292 = vmul.u32 %v290, 4
        %v293 = vmul.u32 %v291, 4
        %v294 = vadd.s32 %v292, %v284
        %v295 = vadd.s32 %v293, %v284
        %v296 = vadd.s32 %v294, 1234
        %v297 = vadd.s32 %v295, 1234
        %v298 = vmul.u32 %v296, 2654435769
        %v299 = vmul.u32 %v297, 2654435769
        %v300 = vshrl.u32 %v298, 16
        %v301 = vshrl.u32 %v299, 16
        %v302 = vxor.u32 %v298, %v300
        %v303 = vxor.u32 %v299, %v301
        %v304 = vmul.u32 %v302, 2246822507
        %v305 = vmul.u32 %v303, 2246822507
        %v306 = vshrl.u32 %v304, 13
        %v307 = vshrl.u32 %v305, 13
        %v308 = vxor.u32 %v304, %v306
        %v309 = vxor.u32 %v305, %v307
        %v310 = vmul.u32 %v308, 3266489909
        %v311 = vmul.u32 %v309, 3266489909
        %v312 = vshrl.u32 %v310, 16
        %v313 = vshrl.u32 %v311, 16
        %v314 = vxor.u32 %v310, %v312
        %v315 = vxor.u32 %v311, %v313
        %v316 = vand.u32 %v314, 8388607
        %v317 = vand.u32 %v315, 8388607
        %vm318 = vcmp.ge.s32.totalorder %v316, 838860
        %vm319 = vcmp.ge.s32.totalorder %v317, 838860
        %v320 = vmul.f32 %v281, 1.1111112
        %v321 = vmul.f32 %v282, 1.1111112
        %v322 = vsel %vm318, %v320, 0.0
        %v323 = vsel %vm319, %v321, 0.0
        %v324 = vpack.c.bf16 %v322, %v322
        %v325 = vpack.c.bf16 %v323, %v323
        %v328 = vcombine.low %v324, %v325
        %v330 = vunpack.c.l.s4 1983009808
        %v331 = vunpack.c.0.s8 %v330
        %v332 = vlaneseq
        %v333 = vshrl.u32 %v332, 7
        %v334 = vsub.s32 %v331, %v333
        %v335 = vrot.slane %v328, %v334
        %337 = vst [vmem:[%s188] sm:$0xf] %v335
        %s338 = sand.u32 %s96, 1
        %s339 = scalar_lea.sflag [#allocation4], %s338
        %s340 = sand.u32 %s96, 1
        %s341 = smul.addr %s340, 4
        %s342 = scalar_lea.vmem [#allocation5], %s341
        // Predicated region
        $region37: #{tpu_custom_call.1} parent=31 // pred_check
          %p343 = pneg %p106
        $region38: #{tpu_custom_call.1} parent=31 // pred_check_branch
          %345 = sbr.rel (%p343) target = $region40
        $region39: #{tpu_custom_call.1} parent=31 // pred_region
          %s346 = smul.u32 2, %s20
          %s348 = ssub.s32 64, 64
          %349 = vsyncadd %s339, %s348
          %s350 = smul.addr %s346, 32
          %s351 = scalar_lea.hbm %s3, %s350
          %s353 = sshll.u32 %s342, 4
          %s354 = int_to_ptr.vmem [resolvable:$true] %s353
          %356 = dma.vmem_to_hbm [thread:$0]  %s354, 64, %s351, %s339
        $region40: #{tpu_custom_call.1} parent=31 // pred_fallthru
          _
      $region32: #{tpu_custom_call.1} parent=5 // pred_fallthru
        _
      %p357 = scmp.le.s32.totalorder 2, %s15
      // Predicated region
      $region41: #{tpu_custom_call.1} parent=5 // pred_check
        %p358 = pneg %p357
      $region42: #{tpu_custom_call.1} parent=5 // pred_check_branch
        %360 = sbr.rel (%p358) target = $region44
      $region43: #{tpu_custom_call.1} parent=5 // pred_region
        %s361 = ssub.s32 %s15, 2
        // Predicated region
        $region45: #{tpu_custom_call.1} parent=43 // pred_check
          %p362 = pneg %p112
        $region46: #{tpu_custom_call.1} parent=43 // pred_check_branch
          %364 = sbr.rel (%p362) target = $region48
        $region47: #{tpu_custom_call.1} parent=43 // pred_region
          %s365 = sand.u32 %s97, 1
          %s366 = scalar_lea.sflag [#allocation4], %s365
          %s367 = sand.u32 %s97, 1
          %s368 = smul.addr %s367, 4
          %s369 = scalar_lea.vmem [#allocation5], %s368
          %370 = dma.done %s366, 64
        $region48: #{tpu_custom_call.1} parent=43 // pred_fallthru
          _
      $region44: #{tpu_custom_call.1} parent=5 // pred_fallthru
        _
    $region6: #{tpu_custom_call.1} parent=1 // loop_footer
      %s19 = sadd.s32 1, %s15
    $region7: #{tpu_custom_call.1} parent=1 // loop_footer_branch
      %14 = sbr.rel target = $region3
    $region8: #{tpu_custom_call.1} parent=1 // loop_exit
      _
    %371 = vsyncpa [#allocation3], 1
    %s372 = scalar_lea.sflag [#allocation3], 1
    %373 = vsyncpa %s372, 1
    %374 = vsyncpa [#allocation4], 1
    %s375 = scalar_lea.sflag [#allocation4], 1
    %376 = vsyncpa %s375, 1

</llo_original>
